<compile_context>
chip_gen: v5e
topology: v5e:2x2
jax: 0.10.0
libtpu: 0.0.40
codegen_flags: <defaults>
</compile_context>

<pallas_src>
import jax
import jax.numpy as jnp
from jax import lax
from jax.experimental import pallas as pl
from jax.experimental.pallas import tpu as pltpu


def _round_up(n, m):
    return ((n + m - 1) // m) * m


def _make_rnn_kernel(t_chunk, t_total, unroll):
    ragged = (t_total % t_chunk) != 0

    def rnn_kernel(x_ref, whh_t_ref, wih_ref, wlin_ref, blin_ref,
                   out_ref, h_ref):
        # x_ref:     (T_CHUNK, B_pad, 1)  raw inputs, time-major (input size == 1)
        # whh_t_ref: (H_pad, H_pad)       W_hh^T, zero-padded
        # wih_ref:   (1, H_pad)           W_ih as a row, zero-padded
        # wlin_ref:  (H_pad, 1)           Linear weight^T
        # blin_ref:  (1, 1)   [SMEM]      Linear bias
        # out_ref:   (B_pad, 1)           linear(h_T)        (block resident across grid)
        # h_ref:     (B_pad, H_pad)       hidden-state carry (block resident across grid)
        tb = pl.program_id(0)

        @pl.when(tb == 0)
        def _():
            h_ref[...] = jnp.zeros_like(h_ref)

        b_pad, h_pad = h_ref.shape
        # Hoist the W_ih lane-broadcast out of the recurrence (JAX won't CSE it).
        wih_b = jnp.broadcast_to(wih_ref[...], (b_pad, h_pad))
        base = tb * t_chunk

        def step(t, h):
            # Input projection done in-kernel: x_t (B_pad,1) broadcast-mul W_ih.
            # W_hh^T is indexed per-use to keep vreg pressure flat as H grows.
            pre = x_ref[t] * wih_b + jnp.dot(
                h, whh_t_ref[...], preferred_element_type=jnp.float32)
            h_new = jnp.tanh(pre)
            if ragged:
                # Padded tail steps (x==0) must not advance the recurrence.
                h_new = jnp.where(base + t < t_total, h_new, h)
            return h_new

        h = lax.fori_loop(0, t_chunk, step, h_ref[...], unroll=unroll)
        h_ref[...] = h

        @pl.when(tb == pl.num_programs(0) - 1)
        def _():
            out_ref[...] = (
                jnp.dot(h, wlin_ref[...], preferred_element_type=jnp.float32)
                + blin_ref[0, 0])

    return rnn_kernel


def rnn_forward(x, w_ih, w_hh, w_lin, b_lin, *, t_chunk=128):
    """x: (B, T, 1) float32.  Returns (out (B,1), h_state (1,B,H))."""
    B, T, I = x.shape
    assert I == 1
    H = w_hh.shape[0]

    B_pad = _round_up(max(B, 8), 8)      # >= 8 sublanes
    H_pad = _round_up(H, 128)            # multiple of 128 lanes

    t_chunk = min(t_chunk, T)
    n_chunks = pl.cdiv(T, t_chunk)
    T_pad = n_chunks * t_chunk
    unroll = t_chunk if t_chunk <= 8 else 8

    # Raw inputs, time-major (T_pad, B_pad, 1) -- no (T, B, H) projection buffer.
    x_tb = jnp.transpose(x.reshape(B, T).astype(jnp.float32))            # (T, B)
    x_tb = jnp.pad(x_tb, ((0, T_pad - T), (0, B_pad - B)))[:, :, None]   # (T_pad, B_pad, 1)

    wih_p = jnp.pad(w_ih.reshape(1, H).astype(jnp.float32),
                    ((0, 0), (0, H_pad - H)))                            # (1, H_pad)
    whh_t_p = jnp.pad(jnp.transpose(w_hh).astype(jnp.float32),
                      ((0, H_pad - H), (0, H_pad - H)))                  # (H_pad, H_pad)
    wlin_p = jnp.pad(jnp.transpose(w_lin).astype(jnp.float32),
                     ((0, H_pad - H), (0, 0)))                           # (H_pad, 1)
    blin = b_lin.reshape(1, 1).astype(jnp.float32)                       # (1, 1)

    kernel = _make_rnn_kernel(t_chunk, T, unroll)

    out_p, h_p = pl.pallas_call(
        kernel,
        grid=(n_chunks,),
        in_specs=[
            pl.BlockSpec((t_chunk, B_pad, 1), lambda t: (t, 0, 0)),   # x chunk (pipelined)
            pl.BlockSpec((H_pad, H_pad), lambda t: (0, 0)),           # W_hh^T (resident)
            pl.BlockSpec((1, H_pad), lambda t: (0, 0)),               # W_ih row (resident)
            pl.BlockSpec((H_pad, 1), lambda t: (0, 0)),               # Linear weight^T
            pl.BlockSpec(memory_space=pltpu.MemorySpace.SMEM),        # Linear bias (scalar)
        ],
        out_specs=(
            pl.BlockSpec((B_pad, 1), lambda t: (0, 0)),               # out (resident)
            pl.BlockSpec((B_pad, H_pad), lambda t: (0, 0)),           # h carry (resident)
        ),
        out_shape=(
            jax.ShapeDtypeStruct((B_pad, 1), jnp.float32),
            jax.ShapeDtypeStruct((B_pad, H_pad), jnp.float32),
        ),
        compiler_params=pltpu.CompilerParams(
            dimension_semantics=("arbitrary",)),                      # sequential recurrence
    )(x_tb, whh_t_p, wih_p, wlin_p, blin)

    out = out_p[:B, :]
    h_state = h_p[:B, :H].reshape(1, B, H)   # PyTorch RNN returns (num_layers, B, H)
    return out, h_state


def rnn_reference(x, w_ih, w_hh, w_lin, b_lin):
    """Pure-JAX reference of the PyTorch forward."""
    B, T, _ = x.shape
    H = w_hh.shape[0]
    h = jnp.zeros((B, H), jnp.float32)
    for t in range(T):
        h = jnp.tanh(x[:, t, :] @ w_ih.T + h @ w_hh.T)
    out = h @ w_lin.T + b_lin
    return out, h.reshape(1, B, H)


if __name__ == "__main__":
    B, T, H = 2, 8, 32

    key = jax.random.PRNGKey(0)
    k_x, k_ih, k_hh, k_lw, k_lb = jax.random.split(key, 5)

    # PyTorch-style uniform(-1/sqrt(H), 1/sqrt(H)) init.
    bound = 1.0 / jnp.sqrt(jnp.float32(H))
    w_ih = jax.random.uniform(k_ih, (H, 1), jnp.float32, -bound, bound)   # rnn.weight_ih_l0
    w_hh = jax.random.uniform(k_hh, (H, H), jnp.float32, -bound, bound)   # rnn.weight_hh_l0
    w_lin = jax.random.uniform(k_lw, (1, H), jnp.float32, -bound, bound)  # linear.weight
    b_lin = jax.random.uniform(k_lb, (1,), jnp.float32, -bound, bound)    # linear.bias

    # x_org[:, :, np.newaxis] -> (B, T, 1) float32, h_state = None (zeros)
    x = jax.random.normal(k_x, (B, T, 1), jnp.float32)

    out, h_state = rnn_forward(x, w_ih, w_hh, w_lin, b_lin)
    out = jax.block_until_ready(out)
    h_state = jax.block_until_ready(h_state)

    out_ref, h_ref = rnn_reference(x, w_ih, w_hh, w_lin, b_lin)
    assert out.shape == (B, 1) and h_state.shape == (1, B, H)
    assert jnp.allclose(out, out_ref, atol=1e-5, rtol=1e-5)
    assert jnp.allclose(h_state, h_ref, atol=1e-5, rtol=1e-5)

    print("KERNEL_OK")
</pallas_src>

<mosaic_0001>
module attributes {stable_mosaic.version = 11 : i64} {
  func.func @rnn_kernel(%arg0: i32, %arg1: memref<8x8x1xf32, #tpu.memory_space<vmem>>, %arg2: memref<128x128xf32, #tpu.memory_space<vmem>>, %arg3: memref<1x128xf32, #tpu.memory_space<vmem>>, %arg4: memref<128x1xf32, #tpu.memory_space<vmem>>, %arg5: memref<1x1xf32, #tpu.memory_space<smem>>, %arg6: memref<8x1xf32, #tpu.memory_space<vmem>>, %arg7: memref<8x128xf32, #tpu.memory_space<vmem>>) attributes {dimension_semantics = [#tpu.dimension_semantics<arbitrary>], iteration_bounds = array<i64: 1>, scalar_prefetch = 0 : i64, scratch_operands = 0 : i64, tpu.core_type = #tpu.core_type<tc>, window_params = [{transform_indices = @transform_0, window_bounds = array<i64: 8, 8, 1>}, {pipeline_mode = #tpu.pipeline_mode<synchronous>, transform_indices = @transform_1, window_bounds = array<i64: 128, 128>}, {pipeline_mode = #tpu.pipeline_mode<synchronous>, transform_indices = @transform_2, window_bounds = array<i64: 1, 128>}, {pipeline_mode = #tpu.pipeline_mode<synchronous>, transform_indices = @transform_3, window_bounds = array<i64: 128, 1>}, {transform_indices = @transform_4, window_bounds = array<i64: 1, 1>}, {pipeline_mode = #tpu.pipeline_mode<synchronous>, transform_indices = @transform_5, window_bounds = array<i64: 8, 1>}, {pipeline_mode = #tpu.pipeline_mode<synchronous>, transform_indices = @transform_6, window_bounds = array<i64: 8, 128>}]} {
    %c0_i32 = arith.constant 0 : i32
    %0 = arith.cmpi eq, %arg0, %c0_i32 : i32
    %1 = arith.extui %0 : i1 to i32
    %c0_i32_0 = arith.constant 0 : i32
    %2 = arith.cmpi ne, %1, %c0_i32_0 : i32
    scf.if %2 {
      %cst_48 = arith.constant 0.000000e+00 : f32
      %83 = vector.broadcast %cst_48 : f32 to vector<8x128xf32>
      %c0_49 = arith.constant 0 : index
      %c0_50 = arith.constant 0 : index
      %84 = vector.load %arg7[%c0_49, %c0_50] : memref<8x128xf32, #tpu.memory_space<vmem>>, vector<8x128xf32>
      tpu.vector_store %arg7[%c0_49, %c0_50], %83 {strides = array<i32>} : memref<8x128xf32, #tpu.memory_space<vmem>>, vector<8x128xf32>,
    } else {
    }
    %c0 = arith.constant 0 : index
    %c0_1 = arith.constant 0 : index
    %3 = vector.load %arg3[%c0, %c0_1] : memref<1x128xf32, #tpu.memory_space<vmem>>, vector<1x128xf32>
    %4 = vector.shape_cast %3 : vector<1x128xf32> to vector<1x128xf32>
    %5 = vector.broadcast %4 : vector<1x128xf32> to vector<8x128xf32>
    %c0_2 = arith.constant 0 : index
    %c0_3 = arith.constant 0 : index
    %6 = vector.load %arg7[%c0_2, %c0_3] : memref<8x128xf32, #tpu.memory_space<vmem>>, vector<8x128xf32>
    %c0_i32_4 = arith.constant 0 : i32
    %7 = arith.index_cast %c0_i32_4 : i32 to index
    %c0_5 = arith.constant 0 : index
    %c0_6 = arith.constant 0 : index
    %8 = vector.load %arg1[%7, %c0_5, %c0_6] : memref<8x8x1xf32, #tpu.memory_space<vmem>>, vector<1x8x1xf32>
    %9 = vector.shape_cast %8 : vector<1x8x1xf32> to vector<8x1xf32>
    %10 = vector.broadcast %9 : vector<8x1xf32> to vector<8x128xf32>
    %11 = arith.mulf %10, %5 : vector<8x128xf32>
    %c0_7 = arith.constant 0 : index
    %c0_8 = arith.constant 0 : index
    %12 = vector.load %arg2[%c0_7, %c0_8] : memref<128x128xf32, #tpu.memory_space<vmem>>, vector<128x128xf32>
    %cst = arith.constant dense<0.000000e+00> : vector<8x128xf32>
    %13 = tpu.matmul %6, %12, %cst {dimension_numbers = #tpu.dot_dimension_numbers<[1], [0], [0], [1], [0, 0, 1, 1], [], []>} : vector<8x128xf32>, vector<128x128xf32>, vector<8x128xf32> -> vector<8x128xf32>
    %14 = arith.addf %11, %13 : vector<8x128xf32>
    %15 = math.tanh %14 : vector<8x128xf32>
    %c1_i32 = arith.constant 1 : i32
    %16 = arith.index_cast %c1_i32 : i32 to index
    %c0_9 = arith.constant 0 : index
    %c0_10 = arith.constant 0 : index
    %17 = vector.load %arg1[%16, %c0_9, %c0_10] : memref<8x8x1xf32, #tpu.memory_space<vmem>>, vector<1x8x1xf32>
    %18 = vector.shape_cast %17 : vector<1x8x1xf32> to vector<8x1xf32>
    %19 = vector.broadcast %18 : vector<8x1xf32> to vector<8x128xf32>
    %20 = arith.mulf %19, %5 : vector<8x128xf32>
    %c0_11 = arith.constant 0 : index
    %c0_12 = arith.constant 0 : index
    %21 = vector.load %arg2[%c0_11, %c0_12] : memref<128x128xf32, #tpu.memory_space<vmem>>, vector<128x128xf32>
    %cst_13 = arith.constant dense<0.000000e+00> : vector<8x128xf32>
    %22 = tpu.matmul %15, %21, %cst_13 {dimension_numbers = #tpu.dot_dimension_numbers<[1], [0], [0], [1], [0, 0, 1, 1], [], []>} : vector<8x128xf32>, vector<128x128xf32>, vector<8x128xf32> -> vector<8x128xf32>
    %23 = arith.addf %20, %22 : vector<8x128xf32>
    %24 = math.tanh %23 : vector<8x128xf32>
    %c2_i32 = arith.constant 2 : i32
    %25 = arith.index_cast %c2_i32 : i32 to index
    %c0_14 = arith.constant 0 : index
    %c0_15 = arith.constant 0 : index
    %26 = vector.load %arg1[%25, %c0_14, %c0_15] : memref<8x8x1xf32, #tpu.memory_space<vmem>>, vector<1x8x1xf32>
    %27 = vector.shape_cast %26 : vector<1x8x1xf32> to vector<8x1xf32>
    %28 = vector.broadcast %27 : vector<8x1xf32> to vector<8x128xf32>
    %29 = arith.mulf %28, %5 : vector<8x128xf32>
    %c0_16 = arith.constant 0 : index
    %c0_17 = arith.constant 0 : index
    %30 = vector.load %arg2[%c0_16, %c0_17] : memref<128x128xf32, #tpu.memory_space<vmem>>, vector<128x128xf32>
    %cst_18 = arith.constant dense<0.000000e+00> : vector<8x128xf32>
    %31 = tpu.matmul %24, %30, %cst_18 {dimension_numbers = #tpu.dot_dimension_numbers<[1], [0], [0], [1], [0, 0, 1, 1], [], []>} : vector<8x128xf32>, vector<128x128xf32>, vector<8x128xf32> -> vector<8x128xf32>
    %32 = arith.addf %29, %31 : vector<8x128xf32>
    %33 = math.tanh %32 : vector<8x128xf32>
    %c3_i32 = arith.constant 3 : i32
    %34 = arith.index_cast %c3_i32 : i32 to index
    %c0_19 = arith.constant 0 : index
    %c0_20 = arith.constant 0 : index
    %35 = vector.load %arg1[%34, %c0_19, %c0_20] : memref<8x8x1xf32, #tpu.memory_space<vmem>>, vector<1x8x1xf32>
    %36 = vector.shape_cast %35 : vector<1x8x1xf32> to vector<8x1xf32>
    %37 = vector.broadcast %36 : vector<8x1xf32> to vector<8x128xf32>
    %38 = arith.mulf %37, %5 : vector<8x128xf32>
    %c0_21 = arith.constant 0 : index
    %c0_22 = arith.constant 0 : index
    %39 = vector.load %arg2[%c0_21, %c0_22] : memref<128x128xf32, #tpu.memory_space<vmem>>, vector<128x128xf32>
    %cst_23 = arith.constant dense<0.000000e+00> : vector<8x128xf32>
    %40 = tpu.matmul %33, %39, %cst_23 {dimension_numbers = #tpu.dot_dimension_numbers<[1], [0], [0], [1], [0, 0, 1, 1], [], []>} : vector<8x128xf32>, vector<128x128xf32>, vector<8x128xf32> -> vector<8x128xf32>
    %41 = arith.addf %38, %40 : vector<8x128xf32>
    %42 = math.tanh %41 : vector<8x128xf32>
    %c4_i32 = arith.constant 4 : i32
    %43 = arith.index_cast %c4_i32 : i32 to index
    %c0_24 = arith.constant 0 : index
    %c0_25 = arith.constant 0 : index
    %44 = vector.load %arg1[%43, %c0_24, %c0_25] : memref<8x8x1xf32, #tpu.memory_space<vmem>>, vector<1x8x1xf32>
    %45 = vector.shape_cast %44 : vector<1x8x1xf32> to vector<8x1xf32>
    %46 = vector.broadcast %45 : vector<8x1xf32> to vector<8x128xf32>
    %47 = arith.mulf %46, %5 : vector<8x128xf32>
    %c0_26 = arith.constant 0 : index
    %c0_27 = arith.constant 0 : index
    %48 = vector.load %arg2[%c0_26, %c0_27] : memref<128x128xf32, #tpu.memory_space<vmem>>, vector<128x128xf32>
    %cst_28 = arith.constant dense<0.000000e+00> : vector<8x128xf32>
    %49 = tpu.matmul %42, %48, %cst_28 {dimension_numbers = #tpu.dot_dimension_numbers<[1], [0], [0], [1], [0, 0, 1, 1], [], []>} : vector<8x128xf32>, vector<128x128xf32>, vector<8x128xf32> -> vector<8x128xf32>
    %50 = arith.addf %47, %49 : vector<8x128xf32>
    %51 = math.tanh %50 : vector<8x128xf32>
    %c5_i32 = arith.constant 5 : i32
    %52 = arith.index_cast %c5_i32 : i32 to index
    %c0_29 = arith.constant 0 : index
    %c0_30 = arith.constant 0 : index
    %53 = vector.load %arg1[%52, %c0_29, %c0_30] : memref<8x8x1xf32, #tpu.memory_space<vmem>>, vector<1x8x1xf32>
    %54 = vector.shape_cast %53 : vector<1x8x1xf32> to vector<8x1xf32>
    %55 = vector.broadcast %54 : vector<8x1xf32> to vector<8x128xf32>
    %56 = arith.mulf %55, %5 : vector<8x128xf32>
    %c0_31 = arith.constant 0 : index
    %c0_32 = arith.constant 0 : index
    %57 = vector.load %arg2[%c0_31, %c0_32] : memref<128x128xf32, #tpu.memory_space<vmem>>, vector<128x128xf32>
    %cst_33 = arith.constant dense<0.000000e+00> : vector<8x128xf32>
    %58 = tpu.matmul %51, %57, %cst_33 {dimension_numbers = #tpu.dot_dimension_numbers<[1], [0], [0], [1], [0, 0, 1, 1], [], []>} : vector<8x128xf32>, vector<128x128xf32>, vector<8x128xf32> -> vector<8x128xf32>
    %59 = arith.addf %56, %58 : vector<8x128xf32>
    %60 = math.tanh %59 : vector<8x128xf32>
    %c6_i32 = arith.constant 6 : i32
    %61 = arith.index_cast %c6_i32 : i32 to index
    %c0_34 = arith.constant 0 : index
    %c0_35 = arith.constant 0 : index
    %62 = vector.load %arg1[%61, %c0_34, %c0_35] : memref<8x8x1xf32, #tpu.memory_space<vmem>>, vector<1x8x1xf32>
    %63 = vector.shape_cast %62 : vector<1x8x1xf32> to vector<8x1xf32>
    %64 = vector.broadcast %63 : vector<8x1xf32> to vector<8x128xf32>
    %65 = arith.mulf %64, %5 : vector<8x128xf32>
    %c0_36 = arith.constant 0 : index
    %c0_37 = arith.constant 0 : index
    %66 = vector.load %arg2[%c0_36, %c0_37] : memref<128x128xf32, #tpu.memory_space<vmem>>, vector<128x128xf32>
    %cst_38 = arith.constant dense<0.000000e+00> : vector<8x128xf32>
    %67 = tpu.matmul %60, %66, %cst_38 {dimension_numbers = #tpu.dot_dimension_numbers<[1], [0], [0], [1], [0, 0, 1, 1], [], []>} : vector<8x128xf32>, vector<128x128xf32>, vector<8x128xf32> -> vector<8x128xf32>
    %68 = arith.addf %65, %67 : vector<8x128xf32>
    %69 = math.tanh %68 : vector<8x128xf32>
    %c7_i32 = arith.constant 7 : i32
    %70 = arith.index_cast %c7_i32 : i32 to index
    %c0_39 = arith.constant 0 : index
    %c0_40 = arith.constant 0 : index
    %71 = vector.load %arg1[%70, %c0_39, %c0_40] : memref<8x8x1xf32, #tpu.memory_space<vmem>>, vector<1x8x1xf32>
    %72 = vector.shape_cast %71 : vector<1x8x1xf32> to vector<8x1xf32>
    %73 = vector.broadcast %72 : vector<8x1xf32> to vector<8x128xf32>
    %74 = arith.mulf %73, %5 : vector<8x128xf32>
    %c0_41 = arith.constant 0 : index
    %c0_42 = arith.constant 0 : index
    %75 = vector.load %arg2[%c0_41, %c0_42] : memref<128x128xf32, #tpu.memory_space<vmem>>, vector<128x128xf32>
    %cst_43 = arith.constant dense<0.000000e+00> : vector<8x128xf32>
    %76 = tpu.matmul %69, %75, %cst_43 {dimension_numbers = #tpu.dot_dimension_numbers<[1], [0], [0], [1], [0, 0, 1, 1], [], []>} : vector<8x128xf32>, vector<128x128xf32>, vector<8x128xf32> -> vector<8x128xf32>
    %77 = arith.addf %74, %76 : vector<8x128xf32>
    %78 = math.tanh %77 : vector<8x128xf32>
    %c8_i32 = arith.constant 8 : i32
    %c0_44 = arith.constant 0 : index
    %c0_45 = arith.constant 0 : index
    %79 = vector.load %arg7[%c0_44, %c0_45] : memref<8x128xf32, #tpu.memory_space<vmem>>, vector<8x128xf32>
    tpu.vector_store %arg7[%c0_44, %c0_45], %78 {strides = array<i32>} : memref<8x128xf32, #tpu.memory_space<vmem>>, vector<8x128xf32>,
    %c0_i32_46 = arith.constant 0 : i32
    %80 = arith.cmpi eq, %arg0, %c0_i32_46 : i32
    %81 = arith.extui %80 : i1 to i32
    %c0_i32_47 = arith.constant 0 : i32
    %82 = arith.cmpi ne, %81, %c0_i32_47 : i32
    scf.if %82 {
      %c0_48 = arith.constant 0 : index
      %c0_49 = arith.constant 0 : index
      %83 = vector.load %arg4[%c0_48, %c0_49] : memref<128x1xf32, #tpu.memory_space<vmem>>, vector<128x1xf32>
      %cst_50 = arith.constant dense<0.000000e+00> : vector<8x1xf32>
      %84 = tpu.matmul %78, %83, %cst_50 {dimension_numbers = #tpu.dot_dimension_numbers<[1], [0], [0], [1], [0, 0, 1, 1], [], []>} : vector<8x128xf32>, vector<128x1xf32>, vector<8x1xf32> -> vector<8x1xf32>
      %c0_51 = arith.constant 0 : index
      %c0_52 = arith.constant 0 : index
      %85 = memref.load %arg5[%c0_51, %c0_52] : memref<1x1xf32, #tpu.memory_space<smem>>
      %86 = vector.broadcast %85 : f32 to vector<8x1xf32>
      %87 = arith.addf %84, %86 : vector<8x1xf32>
      %c0_53 = arith.constant 0 : index
      %c0_54 = arith.constant 0 : index
      %88 = vector.load %arg6[%c0_53, %c0_54] : memref<8x1xf32, #tpu.memory_space<vmem>>, vector<8x1xf32>
      tpu.vector_store %arg6[%c0_53, %c0_54], %87 {strides = array<i32>} : memref<8x1xf32, #tpu.memory_space<vmem>>, vector<8x1xf32>,
    } else {
    }
    return
  }
  func.func @transform_0(%arg0: i32) -> (i32, i32, i32) {
    %c0_i32 = arith.constant 0 : i32
    %c0_i32_0 = arith.constant 0 : i32
    %c0_i32_1 = arith.constant 0 : i32
    return %arg0, %c0_i32, %c0_i32_0 : i32, i32, i32
  }
  func.func @transform_1(%arg0: i32) -> (i32, i32) {
    %c0_i32 = arith.constant 0 : i32
    %c0_i32_0 = arith.constant 0 : i32
    %c0_i32_1 = arith.constant 0 : i32
    return %c0_i32, %c0_i32_0 : i32, i32
  }
  func.func @transform_2(%arg0: i32) -> (i32, i32) {
    %c0_i32 = arith.constant 0 : i32
    %c0_i32_0 = arith.constant 0 : i32
    %c0_i32_1 = arith.constant 0 : i32
    return %c0_i32, %c0_i32_0 : i32, i32
  }
  func.func @transform_3(%arg0: i32) -> (i32, i32) {
    %c0_i32 = arith.constant 0 : i32
    %c0_i32_0 = arith.constant 0 : i32
    %c0_i32_1 = arith.constant 0 : i32
    return %c0_i32, %c0_i32_0 : i32, i32
  }
  func.func @transform_4(%arg0: i32) -> (i32, i32) {
    %c0_i32 = arith.constant 0 : i32
    %c0_i32_0 = arith.constant 0 : i32
    %c0_i32_1 = arith.constant 0 : i32
    return %c0_i32, %c0_i32_0 : i32, i32
  }
  func.func @transform_5(%arg0: i32) -> (i32, i32) {
    %c0_i32 = arith.constant 0 : i32
    %c0_i32_0 = arith.constant 0 : i32
    %c0_i32_1 = arith.constant 0 : i32
    return %c0_i32, %c0_i32_0 : i32, i32
  }
  func.func @transform_6(%arg0: i32) -> (i32, i32) {
    %c0_i32 = arith.constant 0 : i32
    %c0_i32_0 = arith.constant 0 : i32
    %c0_i32_1 = arith.constant 0 : i32
    return %c0_i32, %c0_i32_0 : i32, i32
  }
}

</mosaic_0001>

<llo_original>
// kernel: tpu_custom_call.1
$region0: #{tpu_custom_call.1}
  #allocation0 [shape = 'u32[]', space=smem, size = 0x4, offset = 0x4, fixed_abs, tag = 'smem constant byte address 0x4 - core index']
  #allocation1 [shape = 'u32[72,128]{1,0:T(1,128)}', space=vmem, size = 0x9000, scoped, tag = 'internal scratch']
  #allocation2 [shape = 'f32[1,1]{1,0:T(1,128)S(6)}', space=smem, size = 0x200, scoped, tag = 'scoped memory for tpu_custom_call.1']
  %s0 = inlined_call_operand.vmem [shape: f32[8,8,1], index: 0, kind: input, shape index: {}]
  %s1 = inlined_call_operand.vmem [shape: f32[128,128], index: 1, kind: input, shape index: {}]
  %s2 = inlined_call_operand.vmem [shape: f32[1,128], index: 2, kind: input, shape index: {}]
  %s3 = inlined_call_operand.vmem [shape: f32[128,1], index: 3, kind: input, shape index: {}]
  %s4 = inlined_call_operand.<no memory space> [shape: f32[1,1], index: 4, kind: input, shape index: {}]
  %s5 = inlined_call_operand.vmem [shape: f32[8,1], index: 5, kind: output, shape index: {0}]
  %s6 = inlined_call_operand.hbm [shape: f32[8,128], index: 6, kind: output, shape index: {1}]
  %7 = xla_tuple %s5, %s6
  %s8 = sld [smem:[#allocation0]]
  $region46: #{tpu_custom_call.1} parent=0
    _
  %s10 = ssub.s32 1, %s8
  %s11 = scalar_select 0, %s10, %s8
  %12 = sst [smem:[#allocation2]] %s4
  $region1: #{tpu_custom_call.1} parent=0
    #allocation3 [shape = 'u8[4096]{0}', space=vmem, size = 0x1000, scoped, tag = 'output window, operand 1, single buffered']
    #allocation4 [shape = 's32[1]{0}', space=sflag, size = 0x4, scoped, tag = 'scoped memory for tpu_custom_call.1']
    %13 = vsyncpa [#allocation4], 0
    // Predicated region
    $region2: #{tpu_custom_call.1} parent=1 // pred_check
      _
    $region3: #{tpu_custom_call.1} parent=1 // pred_check_branch
      %15 = sbr.rel (0) target = $region5
    $region4: #{tpu_custom_call.1} parent=1 // pred_region
      _
    $region5: #{tpu_custom_call.1} parent=1 // pred_fallthru
      _
    // Predicated region
    $region6: #{tpu_custom_call.1} parent=1 // pred_check
      _
    $region7: #{tpu_custom_call.1} parent=1 // pred_check_branch
      %17 = sbr.rel (0) target = $region9
    $region8: #{tpu_custom_call.1} parent=1 // pred_region
      _
    $region9: #{tpu_custom_call.1} parent=1 // pred_fallthru
      _
    // Predicated region
    $region10: #{tpu_custom_call.1} parent=1 // pred_check
      _
    $region11: #{tpu_custom_call.1} parent=1 // pred_check_branch
      %19 = sbr.rel (0) target = $region13
    $region12: #{tpu_custom_call.1} parent=1 // pred_region
      _
    $region13: #{tpu_custom_call.1} parent=1 // pred_fallthru
      _
    // Predicated region
    $region14: #{tpu_custom_call.1} parent=1 // pred_check
      _
    $region15: #{tpu_custom_call.1} parent=1 // pred_check_branch
      %21 = sbr.rel (0) target = $region17
    $region16: #{tpu_custom_call.1} parent=1 // pred_region
      _
    $region17: #{tpu_custom_call.1} parent=1 // pred_fallthru
      _
    // Predicated region
    $region18: #{tpu_custom_call.1} parent=1 // pred_check
      _
    $region19: #{tpu_custom_call.1} parent=1 // pred_check_branch
      %23 = sbr.rel (0) target = $region21
    $region20: #{tpu_custom_call.1} parent=1 // pred_region
      _
    $region21: #{tpu_custom_call.1} parent=1 // pred_fallthru
      _
    %p24 = scmp.eq.s32.totalorder 0, 0
    // Predicated region
    $region22: #{tpu_custom_call.1} parent=1 // pred_check
      %p25 = pneg %p24
    $region23: #{tpu_custom_call.1} parent=1 // pred_check_branch
      %27 = sbr.rel (%p25) target = $region25
    $region24: #{tpu_custom_call.1} parent=1 // pred_region
      %28 = vst [vmem:[#allocation3] sm:$0xff] 0.0
    $region25: #{tpu_custom_call.1} parent=1 // pred_fallthru
      _
    %v29 = vld [vmem:[%s2] sm:$0x1]
    %v31 = vperm.slane %v29, 0
    %v33 = vld [vmem:[#allocation3] sm:$0xff]
    %v34 = vld [vmem:[%s0] sm:$0xff]
    %36 = vset.pattern.permute.xlu0 0
    %37 = vperm.xlu0 %36, %v34
    %v38 = vpop.permute.xlu0 %37
    %v40 = vmul.f32 %v38, %v31
    %v41 = vld [vmem:[%s1] sm:$0xff]
    %v42 = vld [vmem:[%s1 + $0x8] sm:$0xff]
    %v43 = vld [vmem:[%s1 + $0x10] sm:$0xff]
    %v44 = vld [vmem:[%s1 + $0x18] sm:$0xff]
    %v45 = vld [vmem:[%s1 + $0x20] sm:$0xff]
    %v46 = vld [vmem:[%s1 + $0x28] sm:$0xff]
    %v47 = vld [vmem:[%s1 + $0x30] sm:$0xff]
    %v48 = vld [vmem:[%s1 + $0x38] sm:$0xff]
    %v49 = vld [vmem:[%s1 + $0x40] sm:$0xff]
    %v50 = vld [vmem:[%s1 + $0x48] sm:$0xff]
    %v51 = vld [vmem:[%s1 + $0x50] sm:$0xff]
    %v52 = vld [vmem:[%s1 + $0x58] sm:$0xff]
    %v53 = vld [vmem:[%s1 + $0x60] sm:$0xff]
    %v54 = vld [vmem:[%s1 + $0x68] sm:$0xff]
    %v55 = vld [vmem:[%s1 + $0x70] sm:$0xff]
    %v56 = vld [vmem:[%s1 + $0x78] sm:$0xff]
    %57 = vmatpush.msra.mxu0 %v56
    %58 = vmatpush.msra.mxu0 %v55
    %59 = vmatpush.msra.mxu0 %v54
    %60 = vmatpush.msra.mxu0 %v53
    %61 = vmatpush.msra.mxu0 %v52
    %62 = vmatpush.msra.mxu0 %v51
    %63 = vmatpush.msra.mxu0 %v50
    %64 = vmatpush.msra.mxu0 %v49
    %65 = vmatpush.msra.mxu0 %v48
    %66 = vmatpush.msra.mxu0 %v47
    %67 = vmatpush.msra.mxu0 %v46
    %68 = vmatpush.msra.mxu0 %v45
    %69 = vmatpush.msra.mxu0 %v44
    %70 = vmatpush.msra.mxu0 %v43
    %71 = vmatpush.msra.mxu0 %v42
    %72 = vmatpush.msra.mxu0 %v41
    %73 = vmatmul.f32.gmra.mxu0 %v33
    %v74 = vpop.f32.mrf.mxu0
    %v75 = vadd.f32 0.0, %v74
    %76 = vdwg.mxu0
    %v77 = vadd.f32 %v40, %v75
    %v78 = vtanh.pop %v77
    %s79 = scalar_lea.vmem %s0, 8
    %v80 = vld [vmem:[%s79] sm:$0xff]
    %82 = vset.pattern.permute.xlu0 0
    %83 = vperm.xlu0 %82, %v80
    %v84 = vpop.permute.xlu0 %83
    %v86 = vmul.f32 %v84, %v31
    %87 = vmatpush.msra.mxu0 %v56
    %88 = vmatpush.msra.mxu0 %v55
    %89 = vmatpush.msra.mxu0 %v54
    %90 = vmatpush.msra.mxu0 %v53
    %91 = vmatpush.msra.mxu0 %v52
    %92 = vmatpush.msra.mxu0 %v51
    %93 = vmatpush.msra.mxu0 %v50
    %94 = vmatpush.msra.mxu0 %v49
    %95 = vmatpush.msra.mxu0 %v48
    %96 = vmatpush.msra.mxu0 %v47
    %97 = vmatpush.msra.mxu0 %v46
    %98 = vmatpush.msra.mxu0 %v45
    %99 = vmatpush.msra.mxu0 %v44
    %100 = vmatpush.msra.mxu0 %v43
    %101 = vmatpush.msra.mxu0 %v42
    %102 = vmatpush.msra.mxu0 %v41
    %103 = vmatmul.f32.gmra.mxu0 %v78
    %v104 = vpop.f32.mrf.mxu0
    %v105 = vadd.f32 0.0, %v104
    %106 = vdwg.mxu0
    %v107 = vadd.f32 %v86, %v105
    %v108 = vtanh.pop %v107
    %s109 = scalar_lea.vmem %s0, 16
    %v110 = vld [vmem:[%s109] sm:$0xff]
    %112 = vset.pattern.permute.xlu0 0
    %113 = vperm.xlu0 %112, %v110
    %v114 = vpop.permute.xlu0 %113
    %v116 = vmul.f32 %v114, %v31
    %117 = vmatpush.msra.mxu0 %v56
    %118 = vmatpush.msra.mxu0 %v55
    %119 = vmatpush.msra.mxu0 %v54
    %120 = vmatpush.msra.mxu0 %v53
    %121 = vmatpush.msra.mxu0 %v52
    %122 = vmatpush.msra.mxu0 %v51
    %123 = vmatpush.msra.mxu0 %v50
    %124 = vmatpush.msra.mxu0 %v49
    %125 = vmatpush.msra.mxu0 %v48
    %126 = vmatpush.msra.mxu0 %v47
    %127 = vmatpush.msra.mxu0 %v46
    %128 = vmatpush.msra.mxu0 %v45
    %129 = vmatpush.msra.mxu0 %v44
    %130 = vmatpush.msra.mxu0 %v43
    %131 = vmatpush.msra.mxu0 %v42
    %132 = vmatpush.msra.mxu0 %v41
    %133 = vmatmul.f32.gmra.mxu0 %v108
    %v134 = vpop.f32.mrf.mxu0
    %v135 = vadd.f32 0.0, %v134
    %136 = vdwg.mxu0
    %v137 = vadd.f32 %v116, %v135
    %v138 = vtanh.pop %v137
    %s139 = scalar_lea.vmem %s0, 24
    %v140 = vld [vmem:[%s139] sm:$0xff]
    %142 = vset.pattern.permute.xlu0 0
    %143 = vperm.xlu0 %142, %v140
    %v144 = vpop.permute.xlu0 %143
    %v146 = vmul.f32 %v144, %v31
    %147 = vmatpush.msra.mxu0 %v56
    %148 = vmatpush.msra.mxu0 %v55
    %149 = vmatpush.msra.mxu0 %v54
    %150 = vmatpush.msra.mxu0 %v53
    %151 = vmatpush.msra.mxu0 %v52
    %152 = vmatpush.msra.mxu0 %v51
    %153 = vmatpush.msra.mxu0 %v50
    %154 = vmatpush.msra.mxu0 %v49
    %155 = vmatpush.msra.mxu0 %v48
    %156 = vmatpush.msra.mxu0 %v47
    %157 = vmatpush.msra.mxu0 %v46
    %158 = vmatpush.msra.mxu0 %v45
    %159 = vmatpush.msra.mxu0 %v44
    %160 = vmatpush.msra.mxu0 %v43
    %161 = vmatpush.msra.mxu0 %v42
    %162 = vmatpush.msra.mxu0 %v41
    %163 = vmatmul.f32.gmra.mxu0 %v138
    %v164 = vpop.f32.mrf.mxu0
    %v165 = vadd.f32 0.0, %v164
    %166 = vdwg.mxu0
    %v167 = vadd.f32 %v146, %v165
    %v168 = vtanh.pop %v167
    %s169 = scalar_lea.vmem %s0, 32
    %v170 = vld [vmem:[%s169] sm:$0xff]
    %172 = vset.pattern.permute.xlu0 0
    %173 = vperm.xlu0 %172, %v170
    %v174 = vpop.permute.xlu0 %173
    %v176 = vmul.f32 %v174, %v31
    %177 = vmatpush.msra.mxu0 %v56
    %178 = vmatpush.msra.mxu0 %v55
    %179 = vmatpush.msra.mxu0 %v54
    %180 = vmatpush.msra.mxu0 %v53
    %181 = vmatpush.msra.mxu0 %v52
    %182 = vmatpush.msra.mxu0 %v51
    %183 = vmatpush.msra.mxu0 %v50
    %184 = vmatpush.msra.mxu0 %v49
    %185 = vmatpush.msra.mxu0 %v48
    %186 = vmatpush.msra.mxu0 %v47
    %187 = vmatpush.msra.mxu0 %v46
    %188 = vmatpush.msra.mxu0 %v45
    %189 = vmatpush.msra.mxu0 %v44
    %190 = vmatpush.msra.mxu0 %v43
    %191 = vmatpush.msra.mxu0 %v42
    %192 = vmatpush.msra.mxu0 %v41
    %193 = vmatmul.f32.gmra.mxu0 %v168
    %v194 = vpop.f32.mrf.mxu0
    %v195 = vadd.f32 0.0, %v194
    %196 = vdwg.mxu0
    %v197 = vadd.f32 %v176, %v195
    %v198 = vtanh.pop %v197
    %s199 = scalar_lea.vmem %s0, 40
    %v200 = vld [vmem:[%s199] sm:$0xff]
    %202 = vset.pattern.permute.xlu0 0
    %203 = vperm.xlu0 %202, %v200
    %v204 = vpop.permute.xlu0 %203
    %v206 = vmul.f32 %v204, %v31
    %207 = vmatpush.msra.mxu0 %v56
    %208 = vmatpush.msra.mxu0 %v55
    %209 = vmatpush.msra.mxu0 %v54
    %210 = vmatpush.msra.mxu0 %v53
    %211 = vmatpush.msra.mxu0 %v52
    %212 = vmatpush.msra.mxu0 %v51
    %213 = vmatpush.msra.mxu0 %v50
    %214 = vmatpush.msra.mxu0 %v49
    %215 = vmatpush.msra.mxu0 %v48
    %216 = vmatpush.msra.mxu0 %v47
    %217 = vmatpush.msra.mxu0 %v46
    %218 = vmatpush.msra.mxu0 %v45
    %219 = vmatpush.msra.mxu0 %v44
    %220 = vmatpush.msra.mxu0 %v43
    %221 = vmatpush.msra.mxu0 %v42
    %222 = vmatpush.msra.mxu0 %v41
    %223 = vmatmul.f32.gmra.mxu0 %v198
    %v224 = vpop.f32.mrf.mxu0
    %v225 = vadd.f32 0.0, %v224
    %226 = vdwg.mxu0
    %v227 = vadd.f32 %v206, %v225
    %v228 = vtanh.pop %v227
    %s229 = scalar_lea.vmem %s0, 48
    %v230 = vld [vmem:[%s229] sm:$0xff]
    %232 = vset.pattern.permute.xlu0 0
    %233 = vperm.xlu0 %232, %v230
    %v234 = vpop.permute.xlu0 %233
    %v236 = vmul.f32 %v234, %v31
    %237 = vmatpush.msra.mxu0 %v56
    %238 = vmatpush.msra.mxu0 %v55
    %239 = vmatpush.msra.mxu0 %v54
    %240 = vmatpush.msra.mxu0 %v53
    %241 = vmatpush.msra.mxu0 %v52
    %242 = vmatpush.msra.mxu0 %v51
    %243 = vmatpush.msra.mxu0 %v50
    %244 = vmatpush.msra.mxu0 %v49
    %245 = vmatpush.msra.mxu0 %v48
    %246 = vmatpush.msra.mxu0 %v47
    %247 = vmatpush.msra.mxu0 %v46
    %248 = vmatpush.msra.mxu0 %v45
    %249 = vmatpush.msra.mxu0 %v44
    %250 = vmatpush.msra.mxu0 %v43
    %251 = vmatpush.msra.mxu0 %v42
    %252 = vmatpush.msra.mxu0 %v41
    %253 = vmatmul.f32.gmra.mxu0 %v228
    %v254 = vpop.f32.mrf.mxu0
    %v255 = vadd.f32 0.0, %v254
    %256 = vdwg.mxu0
    %v257 = vadd.f32 %v236, %v255
    %v258 = vtanh.pop %v257
    %s259 = scalar_lea.vmem %s0, 56
    %v260 = vld [vmem:[%s259] sm:$0xff]
    %262 = vset.pattern.permute.xlu0 0
    %263 = vperm.xlu0 %262, %v260
    %v264 = vpop.permute.xlu0 %263
    %v266 = vmul.f32 %v264, %v31
    %267 = vmatpush.msra.mxu0 %v56
    %268 = vmatpush.msra.mxu0 %v55
    %269 = vmatpush.msra.mxu0 %v54
    %270 = vmatpush.msra.mxu0 %v53
    %271 = vmatpush.msra.mxu0 %v52
    %272 = vmatpush.msra.mxu0 %v51
    %273 = vmatpush.msra.mxu0 %v50
    %274 = vmatpush.msra.mxu0 %v49
    %275 = vmatpush.msra.mxu0 %v48
    %276 = vmatpush.msra.mxu0 %v47
    %277 = vmatpush.msra.mxu0 %v46
    %278 = vmatpush.msra.mxu0 %v45
    %279 = vmatpush.msra.mxu0 %v44
    %280 = vmatpush.msra.mxu0 %v43
    %281 = vmatpush.msra.mxu0 %v42
    %282 = vmatpush.msra.mxu0 %v41
    %283 = vmatmul.f32.gmra.mxu0 %v258
    %v284 = vpop.f32.mrf.mxu0
    %v285 = vadd.f32 0.0, %v284
    %286 = vdwg.mxu0
    %v287 = vadd.f32 %v266, %v285
    %v288 = vtanh.pop %v287
    %289 = vst [vmem:[#allocation3] sm:$0xff] %v288
    // Predicated region
    $region26: #{tpu_custom_call.1} parent=1 // pred_check
      %p290 = pneg %p24
    $region27: #{tpu_custom_call.1} parent=1 // pred_check_branch
      %292 = sbr.rel (%p290) target = $region29
    $region28: #{tpu_custom_call.1} parent=1 // pred_region
      %v293 = vld [vmem:[%s3] sm:$0xff]
      %v294 = vld [vmem:[%s3 + $0x8] sm:$0xff]
      %v295 = vld [vmem:[%s3 + $0x10] sm:$0xff]
      %v296 = vld [vmem:[%s3 + $0x18] sm:$0xff]
      %v297 = vld [vmem:[%s3 + $0x20] sm:$0xff]
      %v298 = vld [vmem:[%s3 + $0x28] sm:$0xff]
      %v299 = vld [vmem:[%s3 + $0x30] sm:$0xff]
      %v300 = vld [vmem:[%s3 + $0x38] sm:$0xff]
      %v301 = vld [vmem:[%s3 + $0x40] sm:$0xff]
      %v302 = vld [vmem:[%s3 + $0x48] sm:$0xff]
      %v303 = vld [vmem:[%s3 + $0x50] sm:$0xff]
      %v304 = vld [vmem:[%s3 + $0x58] sm:$0xff]
      %v305 = vld [vmem:[%s3 + $0x60] sm:$0xff]
      %v306 = vld [vmem:[%s3 + $0x68] sm:$0xff]
      %v307 = vld [vmem:[%s3 + $0x70] sm:$0xff]
      %v308 = vld [vmem:[%s3 + $0x78] sm:$0xff]
      %s309 = sld [smem:[#allocation2]]
      %v310 = vstv %s309
      %311 = vmatpush.msra.mxu0 %v308
      %312 = vmatpush.msra.mxu0 %v307
      %313 = vmatpush.msra.mxu0 %v306
      %314 = vmatpush.msra.mxu0 %v305
      %315 = vmatpush.msra.mxu0 %v304
      %316 = vmatpush.msra.mxu0 %v303
      %317 = vmatpush.msra.mxu0 %v302
      %318 = vmatpush.msra.mxu0 %v301
      %319 = vmatpush.msra.mxu0 %v300
      %320 = vmatpush.msra.mxu0 %v299
      %321 = vmatpush.msra.mxu0 %v298
      %322 = vmatpush.msra.mxu0 %v297
      %323 = vmatpush.msra.mxu0 %v296
      %324 = vmatpush.msra.mxu0 %v295
      %325 = vmatpush.msra.mxu0 %v294
      %326 = vmatpush.msra.mxu0 %v293
      %327 = vmatmul.f32.gmra.mxu0 %v288
      %v328 = vpop.f32.mrf.mxu0
      %v329 = vadd.f32 %v310, %v328
      %330 = vdwg.mxu0
      %vm331 = vcmask 7168
      %332 = vst.msk [vmem:[%s5] sm:$0xff] %vm331, %v329
    $region29: #{tpu_custom_call.1} parent=1 // pred_fallthru
      _
    // Predicated region
    $region30: #{tpu_custom_call.1} parent=1 // pred_check
      _
    $region31: #{tpu_custom_call.1} parent=1 // pred_check_branch
      %334 = sbr.rel (0) target = $region33
    $region32: #{tpu_custom_call.1} parent=1 // pred_region
      _
    $region33: #{tpu_custom_call.1} parent=1 // pred_fallthru
      _
    // Predicated region
    $region34: #{tpu_custom_call.1} parent=1 // pred_check
      _
    $region35: #{tpu_custom_call.1} parent=1 // pred_check_branch
      %336 = sbr.rel (0) target = $region37
    $region36: #{tpu_custom_call.1} parent=1 // pred_region
      %338 = vsyncadd [#allocation4], 0
      %s340 = sshll.u32 [#allocation3], 4
      %s341 = int_to_ptr.vmem [resolvable:$true] %s340
      %s342 = sshll.u32 %s6, 4
      %s343 = int_to_ptr.hbm [resolvable:$true] %s342
      %345 = dma.vmem_to_hbm [thread:$0]  %s341, 128, %s343, [#allocation4]
    $region37: #{tpu_custom_call.1} parent=1 // pred_fallthru
      _
    // Predicated region
    $region38: #{tpu_custom_call.1} parent=1 // pred_check
      _
    $region39: #{tpu_custom_call.1} parent=1 // pred_check_branch
      %347 = sbr.rel (0) target = $region41
    $region40: #{tpu_custom_call.1} parent=1 // pred_region
      _
    $region41: #{tpu_custom_call.1} parent=1 // pred_fallthru
      _
    // Predicated region
    $region42: #{tpu_custom_call.1} parent=1 // pred_check
      _
    $region43: #{tpu_custom_call.1} parent=1 // pred_check_branch
      %349 = sbr.rel (0) target = $region45
    $region44: #{tpu_custom_call.1} parent=1 // pred_region
      %351 = dma.done [#allocation4], 128
    $region45: #{tpu_custom_call.1} parent=1 // pred_fallthru
      _
    %352 = vsyncpa [#allocation4], 1

</llo_original>
